<compile_context>
chip_gen: v7x
topology: tpu7x:2x2x1
jax: 0.10.0
libtpu: 0.0.40
codegen_flags: <defaults>
</compile_context>

<pallas_src>
import jax
import jax.numpy as jnp
from jax.experimental import pallas as pl
from jax.experimental.pallas import tpu as pltpu


def _patch_embed_kernel(p_ref, wl_ref, wc_ref, bias_ref, o_ref):
    # p_ref   : (Bb, K, S)   patch pixels; S spatial patches on the lane axis
    # wl_ref  : (S, E)       linear weight transposed, compute dtype
    # wc_ref  : (K, O)       conv weight reshaped+transposed, float32
    # bias_ref: (1, O*E)     folded conv+linear bias, float32
    # o_ref   : (Bb, O*E)    lane-dense output block
    Bb, K, S = p_ref.shape
    E = wl_ref.shape[1]
    O = wc_ref.shape[1]

    # Stage 1 (MXU): contract the S spatial dim for the whole batch block with
    # a single 2-D matmul.  M = Bb*K keeps the MXU M dimension full; the RHS
    # (S, E) is stationary across the stream.  f32 accumulation.
    q = jnp.dot(p_ref[...].reshape(Bb * K, S), wl_ref[...],
                preferred_element_type=jnp.float32)          # (Bb*K, E) f32
    q = q.reshape(Bb, K, E)                                   # free: split leading dim

    # Stage 2 (VPU, f32): contract the tiny K = C*p*p dim against the conv
    # weight with a short static loop of broadcast multiply-adds.  No batched
    # 8-row MXU pushes, no transposes, constant code size in block_b.
    # NOTE: assumes K is small (true for small patch sizes / channel counts).
    wc = wc_ref[...]                                          # (K, O) f32
    acc = jnp.zeros((Bb, O, E), jnp.float32)
    for k in range(K):
        acc = acc + wc[k][None, :, None] * q[:, k, :][:, None, :]

    # f32 epilogue: folded bias add + cast, one lane-dense store.
    o_ref[...] = (acc.reshape(Bb, O * E) + bias_ref[...]).astype(o_ref.dtype)


def patch_embed_pallas(x, conv_w, conv_b, lin_w, lin_b, patch_size,
                       *, block_b=None, compute_dtype=jnp.bfloat16):
    """x: (B, C, H, W). Returns (B, num_patch, embed_size)."""
    B, C, H, W = x.shape
    p = patch_size
    gh, gw = H // p, W // p
    S = gh * gw
    O = conv_w.shape[0]             # num_patch (conv out channels)
    K = C * p * p
    E = lin_w.shape[0]              # embed_size

    # The PyTorch module hard-codes Linear(in_features=14*14): S must match.
    if lin_w.shape[1] != S:
        raise ValueError(
            f"(H/p)*(W/p)={S} must equal Linear in_features={lin_w.shape[1]}")

    if block_b is None:
        # Large blocks amortize the ~0.35 us fixed per-grid-step cost (each
        # step should move >= ~1 MiB of patches).  When the whole batch would
        # fit in one block and B >= 16, split it in two so the grid stays >= 2
        # (keeps both v7x TensorCores busy).  VMEM use stays far below limits.
        target = 256 if jnp.dtype(compute_dtype).itemsize <= 2 else 128
        if B > target:
            block_b = target
        elif B >= 16:
            half = (B + 1) // 2
            block_b = ((half + 7) // 8) * 8       # round up to a sublane multiple
        else:
            block_b = B
    if not (block_b == B or block_b % 8 == 0):
        raise ValueError("block_b must equal B or be a multiple of 8")

    # Patches (B, K, S): K ordered (c, ph, pw) to match conv weight layout,
    # S ordered (gh, gw) to match Flatten(2,3).  S lands on the lane axis.
    # Cast x to the compute dtype *first* so the materialized intermediate
    # (and the extra HBM pass it implies) is half-size in bf16.
    # TODO(synk): fold the patch extraction into the kernel (strided in-kernel
    # loads of (block_b, C, H, W) blocks) to remove this HBM intermediate.
    x_c = x.astype(compute_dtype)
    patches = x_c.reshape(B, C, gh, p, gw, p).transpose(0, 1, 3, 5, 2, 4)
    patches = patches.reshape(B, K, S)

    wl_t = lin_w.T.astype(compute_dtype)                   # (S, E)
    wc_t = conv_w.reshape(O, K).T.astype(jnp.float32)      # (K, O) — f32 VPU stage

    # Fold both biases: out += lin_b[e] + conv_b[o] * sum_s lin_w[e, s]
    bias = (lin_b[None, :].astype(jnp.float32)
            + conv_b[:, None].astype(jnp.float32)
            * jnp.sum(lin_w.astype(jnp.float32), axis=1)[None, :])  # (O, E)
    bias = bias.reshape(1, O * E)

    itm = jnp.dtype(compute_dtype).itemsize
    cost = pl.CostEstimate(
        flops=2 * B * (K * S * E + K * O * E),
        transcendentals=0,
        bytes_accessed=(B * K * S * itm + S * E * itm + K * O * 4
                        + O * E * 4 + B * O * E * 4),
    )

    out = pl.pallas_call(
        _patch_embed_kernel,
        out_shape=jax.ShapeDtypeStruct((B, O * E), x.dtype),
        grid_spec=pltpu.PrefetchScalarGridSpec(
            num_scalar_prefetch=0,
            grid=(pl.cdiv(B, block_b),),
            in_specs=[
                pl.BlockSpec((block_b, K, S), lambda b: (b, 0, 0)),
                pl.BlockSpec((S, E), lambda b: (0, 0)),
                pl.BlockSpec((K, O), lambda b: (0, 0)),
                pl.BlockSpec((1, O * E), lambda b: (0, 0)),
            ],
            out_specs=pl.BlockSpec((block_b, O * E), lambda b: (b, 0)),
        ),
        compiler_params=pltpu.CompilerParams(
            dimension_semantics=("parallel",)),
        cost_estimate=cost,
    )(patches, wl_t, wc_t, bias)

    return out.reshape(B, O, E)


def patch_embed_reference(x, conv_w, conv_b, lin_w, lin_b, patch_size):
    """Pure-JAX reference matching PyTorch semantics."""
    B, C, H, W = x.shape
    p = patch_size
    gh, gw = H // p, W // p
    O = conv_w.shape[0]
    patches = x.reshape(B, C, gh, p, gw, p).transpose(0, 2, 4, 1, 3, 5)
    patches = patches.reshape(B, gh * gw, C * p * p)
    conv = jnp.einsum('bsk,ok->bso', patches, conv_w.reshape(O, -1)) + conv_b  # (B,S,O)
    conv = conv.transpose(0, 2, 1)                                             # (B,O,S)
    return jnp.einsum('bos,es->boe', conv, lin_w) + lin_b                      # (B,O,E)


if __name__ == "__main__":
    # Linear in_features is hard-coded to 14*14, so (H/p)*(W/p) must be 196.
    # Keep shapes small: patch_size=2 -> H=W=28.
    C = 3
    patch_size = 2
    H = W = 14 * patch_size          # 28
    num_patch = 8                    # conv out channels (O)
    embed_size = 32                  # E

    key = jax.random.PRNGKey(0)
    k_x, k_cw, k_cb, k_lw, k_lb = jax.random.split(key, 5)

    conv_w = 0.05 * jax.random.normal(
        k_cw, (num_patch, C, patch_size, patch_size), jnp.float32)
    conv_b = 0.05 * jax.random.normal(k_cb, (num_patch,), jnp.float32)
    lin_w = 0.05 * jax.random.normal(k_lw, (embed_size, 14 * 14), jnp.float32)
    lin_b = 0.05 * jax.random.normal(k_lb, (embed_size,), jnp.float32)

    # B=2: single full block.  B=20: auto block_b=16 -> grid of 2 with a
    # partial last block (validates OOB-write masking for non-divisible B).
    for B in (2, 20):
        x = jax.random.normal(jax.random.fold_in(k_x, B), (B, C, H, W),
                              jnp.float32)
        ref = patch_embed_reference(x, conv_w, conv_b, lin_w, lin_b, patch_size)

        # f32 operand path (tight tolerance).
        out_f32 = patch_embed_pallas(x, conv_w, conv_b, lin_w, lin_b, patch_size,
                                     compute_dtype=jnp.float32)
        out_f32 = jax.block_until_ready(out_f32)
        assert out_f32.shape == (B, num_patch, embed_size), out_f32.shape
        assert jnp.allclose(out_f32, ref, atol=1e-4, rtol=1e-4), \
            f"f32 mismatch vs reference (B={B})"

        # Default bf16 operand path (f32 accumulation/epilogue), looser tolerance.
        out_bf16 = patch_embed_pallas(x, conv_w, conv_b, lin_w, lin_b, patch_size)
        out_bf16 = jax.block_until_ready(out_bf16)
        assert out_bf16.shape == (B, num_patch, embed_size), out_bf16.shape
        assert jnp.allclose(out_bf16, ref, atol=5e-2, rtol=5e-2), \
            f"bf16 mismatch vs reference (B={B})"

    print("KERNEL_OK")
</pallas_src>

<mosaic_0001>
module attributes {stable_mosaic.version = 11 : i64} {
  func.func @_patch_embed_kernel(%arg0: i32, %arg1: memref<2x12x196xf32, #tpu.memory_space<vmem>>, %arg2: memref<196x32xf32, #tpu.memory_space<vmem>>, %arg3: memref<12x8xf32, #tpu.memory_space<vmem>>, %arg4: memref<1x256xf32, #tpu.memory_space<vmem>>, %arg5: memref<2x256xf32, #tpu.memory_space<vmem>>) attributes {dimension_semantics = [#tpu.dimension_semantics<parallel>], iteration_bounds = array<i64: 1>, scalar_prefetch = 0 : i64, scratch_operands = 0 : i64, tpu.core_type = #tpu.core_type<tc>, window_params = [{transform_indices = @transform_0, window_bounds = array<i64: 2, 12, 196>}, {pipeline_mode = #tpu.pipeline_mode<synchronous>, transform_indices = @transform_1, window_bounds = array<i64: 196, 32>}, {pipeline_mode = #tpu.pipeline_mode<synchronous>, transform_indices = @transform_2, window_bounds = array<i64: 12, 8>}, {pipeline_mode = #tpu.pipeline_mode<synchronous>, transform_indices = @transform_3, window_bounds = array<i64: 1, 256>}, {transform_indices = @transform_4, window_bounds = array<i64: 2, 256>}]} {
    %c0 = arith.constant 0 : index
    %c0_0 = arith.constant 0 : index
    %c0_1 = arith.constant 0 : index
    %0 = vector.load %arg1[%c0, %c0_0, %c0_1] : memref<2x12x196xf32, #tpu.memory_space<vmem>>, vector<2x12x196xf32>
    %1 = vector.shape_cast %0 : vector<2x12x196xf32> to vector<24x196xf32>
    %c0_2 = arith.constant 0 : index
    %c0_3 = arith.constant 0 : index
    %2 = vector.load %arg2[%c0_2, %c0_3] : memref<196x32xf32, #tpu.memory_space<vmem>>, vector<196x32xf32>
    %cst = arith.constant dense<0.000000e+00> : vector<24x32xf32>
    %3 = tpu.matmul %1, %2, %cst {dimension_numbers = #tpu.dot_dimension_numbers<[1], [0], [0], [1], [0, 0, 1, 1], [], []>} : vector<24x196xf32>, vector<196x32xf32>, vector<24x32xf32> -> vector<24x32xf32>
    %4 = vector.shape_cast %3 : vector<24x32xf32> to vector<2x12x32xf32>
    %c0_4 = arith.constant 0 : index
    %c0_5 = arith.constant 0 : index
    %5 = vector.load %arg3[%c0_4, %c0_5] : memref<12x8xf32, #tpu.memory_space<vmem>>, vector<12x8xf32>
    %cst_6 = arith.constant 0.000000e+00 : f32
    %6 = vector.broadcast %cst_6 : f32 to vector<2x8x32xf32>
    %7 = vector.extract_strided_slice %5 {offsets = [0, 0], sizes = [1, 8], strides = [1, 1]} : vector<12x8xf32> to vector<1x8xf32>
    %8 = vector.shape_cast %7 : vector<1x8xf32> to vector<8xf32>
    %9 = vector.shape_cast %8 : vector<8xf32> to vector<1x8x1xf32>
    %10 = vector.extract_strided_slice %4 {offsets = [0, 0, 0], sizes = [2, 1, 32], strides = [1, 1, 1]} : vector<2x12x32xf32> to vector<2x1x32xf32>
    %11 = vector.shape_cast %10 : vector<2x1x32xf32> to vector<2x32xf32>
    %12 = vector.shape_cast %11 : vector<2x32xf32> to vector<2x1x32xf32>
    %13 = vector.broadcast %9 : vector<1x8x1xf32> to vector<2x8x32xf32>
    %14 = vector.broadcast %12 : vector<2x1x32xf32> to vector<2x8x32xf32>
    %15 = arith.mulf %13, %14 : vector<2x8x32xf32>
    %16 = arith.addf %6, %15 : vector<2x8x32xf32>
    %17 = vector.extract_strided_slice %5 {offsets = [1, 0], sizes = [1, 8], strides = [1, 1]} : vector<12x8xf32> to vector<1x8xf32>
    %18 = vector.shape_cast %17 : vector<1x8xf32> to vector<8xf32>
    %19 = vector.shape_cast %18 : vector<8xf32> to vector<1x8x1xf32>
    %20 = vector.extract_strided_slice %4 {offsets = [0, 1, 0], sizes = [2, 1, 32], strides = [1, 1, 1]} : vector<2x12x32xf32> to vector<2x1x32xf32>
    %21 = vector.shape_cast %20 : vector<2x1x32xf32> to vector<2x32xf32>
    %22 = vector.shape_cast %21 : vector<2x32xf32> to vector<2x1x32xf32>
    %23 = vector.broadcast %19 : vector<1x8x1xf32> to vector<2x8x32xf32>
    %24 = vector.broadcast %22 : vector<2x1x32xf32> to vector<2x8x32xf32>
    %25 = arith.mulf %23, %24 : vector<2x8x32xf32>
    %26 = arith.addf %16, %25 : vector<2x8x32xf32>
    %27 = vector.extract_strided_slice %5 {offsets = [2, 0], sizes = [1, 8], strides = [1, 1]} : vector<12x8xf32> to vector<1x8xf32>
    %28 = vector.shape_cast %27 : vector<1x8xf32> to vector<8xf32>
    %29 = vector.shape_cast %28 : vector<8xf32> to vector<1x8x1xf32>
    %30 = vector.extract_strided_slice %4 {offsets = [0, 2, 0], sizes = [2, 1, 32], strides = [1, 1, 1]} : vector<2x12x32xf32> to vector<2x1x32xf32>
    %31 = vector.shape_cast %30 : vector<2x1x32xf32> to vector<2x32xf32>
    %32 = vector.shape_cast %31 : vector<2x32xf32> to vector<2x1x32xf32>
    %33 = vector.broadcast %29 : vector<1x8x1xf32> to vector<2x8x32xf32>
    %34 = vector.broadcast %32 : vector<2x1x32xf32> to vector<2x8x32xf32>
    %35 = arith.mulf %33, %34 : vector<2x8x32xf32>
    %36 = arith.addf %26, %35 : vector<2x8x32xf32>
    %37 = vector.extract_strided_slice %5 {offsets = [3, 0], sizes = [1, 8], strides = [1, 1]} : vector<12x8xf32> to vector<1x8xf32>
    %38 = vector.shape_cast %37 : vector<1x8xf32> to vector<8xf32>
    %39 = vector.shape_cast %38 : vector<8xf32> to vector<1x8x1xf32>
    %40 = vector.extract_strided_slice %4 {offsets = [0, 3, 0], sizes = [2, 1, 32], strides = [1, 1, 1]} : vector<2x12x32xf32> to vector<2x1x32xf32>
    %41 = vector.shape_cast %40 : vector<2x1x32xf32> to vector<2x32xf32>
    %42 = vector.shape_cast %41 : vector<2x32xf32> to vector<2x1x32xf32>
    %43 = vector.broadcast %39 : vector<1x8x1xf32> to vector<2x8x32xf32>
    %44 = vector.broadcast %42 : vector<2x1x32xf32> to vector<2x8x32xf32>
    %45 = arith.mulf %43, %44 : vector<2x8x32xf32>
    %46 = arith.addf %36, %45 : vector<2x8x32xf32>
    %47 = vector.extract_strided_slice %5 {offsets = [4, 0], sizes = [1, 8], strides = [1, 1]} : vector<12x8xf32> to vector<1x8xf32>
    %48 = vector.shape_cast %47 : vector<1x8xf32> to vector<8xf32>
    %49 = vector.shape_cast %48 : vector<8xf32> to vector<1x8x1xf32>
    %50 = vector.extract_strided_slice %4 {offsets = [0, 4, 0], sizes = [2, 1, 32], strides = [1, 1, 1]} : vector<2x12x32xf32> to vector<2x1x32xf32>
    %51 = vector.shape_cast %50 : vector<2x1x32xf32> to vector<2x32xf32>
    %52 = vector.shape_cast %51 : vector<2x32xf32> to vector<2x1x32xf32>
    %53 = vector.broadcast %49 : vector<1x8x1xf32> to vector<2x8x32xf32>
    %54 = vector.broadcast %52 : vector<2x1x32xf32> to vector<2x8x32xf32>
    %55 = arith.mulf %53, %54 : vector<2x8x32xf32>
    %56 = arith.addf %46, %55 : vector<2x8x32xf32>
    %57 = vector.extract_strided_slice %5 {offsets = [5, 0], sizes = [1, 8], strides = [1, 1]} : vector<12x8xf32> to vector<1x8xf32>
    %58 = vector.shape_cast %57 : vector<1x8xf32> to vector<8xf32>
    %59 = vector.shape_cast %58 : vector<8xf32> to vector<1x8x1xf32>
    %60 = vector.extract_strided_slice %4 {offsets = [0, 5, 0], sizes = [2, 1, 32], strides = [1, 1, 1]} : vector<2x12x32xf32> to vector<2x1x32xf32>
    %61 = vector.shape_cast %60 : vector<2x1x32xf32> to vector<2x32xf32>
    %62 = vector.shape_cast %61 : vector<2x32xf32> to vector<2x1x32xf32>
    %63 = vector.broadcast %59 : vector<1x8x1xf32> to vector<2x8x32xf32>
    %64 = vector.broadcast %62 : vector<2x1x32xf32> to vector<2x8x32xf32>
    %65 = arith.mulf %63, %64 : vector<2x8x32xf32>
    %66 = arith.addf %56, %65 : vector<2x8x32xf32>
    %67 = vector.extract_strided_slice %5 {offsets = [6, 0], sizes = [1, 8], strides = [1, 1]} : vector<12x8xf32> to vector<1x8xf32>
    %68 = vector.shape_cast %67 : vector<1x8xf32> to vector<8xf32>
    %69 = vector.shape_cast %68 : vector<8xf32> to vector<1x8x1xf32>
    %70 = vector.extract_strided_slice %4 {offsets = [0, 6, 0], sizes = [2, 1, 32], strides = [1, 1, 1]} : vector<2x12x32xf32> to vector<2x1x32xf32>
    %71 = vector.shape_cast %70 : vector<2x1x32xf32> to vector<2x32xf32>
    %72 = vector.shape_cast %71 : vector<2x32xf32> to vector<2x1x32xf32>
    %73 = vector.broadcast %69 : vector<1x8x1xf32> to vector<2x8x32xf32>
    %74 = vector.broadcast %72 : vector<2x1x32xf32> to vector<2x8x32xf32>
    %75 = arith.mulf %73, %74 : vector<2x8x32xf32>
    %76 = arith.addf %66, %75 : vector<2x8x32xf32>
    %77 = vector.extract_strided_slice %5 {offsets = [7, 0], sizes = [1, 8], strides = [1, 1]} : vector<12x8xf32> to vector<1x8xf32>
    %78 = vector.shape_cast %77 : vector<1x8xf32> to vector<8xf32>
    %79 = vector.shape_cast %78 : vector<8xf32> to vector<1x8x1xf32>
    %80 = vector.extract_strided_slice %4 {offsets = [0, 7, 0], sizes = [2, 1, 32], strides = [1, 1, 1]} : vector<2x12x32xf32> to vector<2x1x32xf32>
    %81 = vector.shape_cast %80 : vector<2x1x32xf32> to vector<2x32xf32>
    %82 = vector.shape_cast %81 : vector<2x32xf32> to vector<2x1x32xf32>
    %83 = vector.broadcast %79 : vector<1x8x1xf32> to vector<2x8x32xf32>
    %84 = vector.broadcast %82 : vector<2x1x32xf32> to vector<2x8x32xf32>
    %85 = arith.mulf %83, %84 : vector<2x8x32xf32>
    %86 = arith.addf %76, %85 : vector<2x8x32xf32>
    %87 = vector.extract_strided_slice %5 {offsets = [8, 0], sizes = [1, 8], strides = [1, 1]} : vector<12x8xf32> to vector<1x8xf32>
    %88 = vector.shape_cast %87 : vector<1x8xf32> to vector<8xf32>
    %89 = vector.shape_cast %88 : vector<8xf32> to vector<1x8x1xf32>
    %90 = vector.extract_strided_slice %4 {offsets = [0, 8, 0], sizes = [2, 1, 32], strides = [1, 1, 1]} : vector<2x12x32xf32> to vector<2x1x32xf32>
    %91 = vector.shape_cast %90 : vector<2x1x32xf32> to vector<2x32xf32>
    %92 = vector.shape_cast %91 : vector<2x32xf32> to vector<2x1x32xf32>
    %93 = vector.broadcast %89 : vector<1x8x1xf32> to vector<2x8x32xf32>
    %94 = vector.broadcast %92 : vector<2x1x32xf32> to vector<2x8x32xf32>
    %95 = arith.mulf %93, %94 : vector<2x8x32xf32>
    %96 = arith.addf %86, %95 : vector<2x8x32xf32>
    %97 = vector.extract_strided_slice %5 {offsets = [9, 0], sizes = [1, 8], strides = [1, 1]} : vector<12x8xf32> to vector<1x8xf32>
    %98 = vector.shape_cast %97 : vector<1x8xf32> to vector<8xf32>
    %99 = vector.shape_cast %98 : vector<8xf32> to vector<1x8x1xf32>
    %100 = vector.extract_strided_slice %4 {offsets = [0, 9, 0], sizes = [2, 1, 32], strides = [1, 1, 1]} : vector<2x12x32xf32> to vector<2x1x32xf32>
    %101 = vector.shape_cast %100 : vector<2x1x32xf32> to vector<2x32xf32>
    %102 = vector.shape_cast %101 : vector<2x32xf32> to vector<2x1x32xf32>
    %103 = vector.broadcast %99 : vector<1x8x1xf32> to vector<2x8x32xf32>
    %104 = vector.broadcast %102 : vector<2x1x32xf32> to vector<2x8x32xf32>
    %105 = arith.mulf %103, %104 : vector<2x8x32xf32>
    %106 = arith.addf %96, %105 : vector<2x8x32xf32>
    %107 = vector.extract_strided_slice %5 {offsets = [10, 0], sizes = [1, 8], strides = [1, 1]} : vector<12x8xf32> to vector<1x8xf32>
    %108 = vector.shape_cast %107 : vector<1x8xf32> to vector<8xf32>
    %109 = vector.shape_cast %108 : vector<8xf32> to vector<1x8x1xf32>
    %110 = vector.extract_strided_slice %4 {offsets = [0, 10, 0], sizes = [2, 1, 32], strides = [1, 1, 1]} : vector<2x12x32xf32> to vector<2x1x32xf32>
    %111 = vector.shape_cast %110 : vector<2x1x32xf32> to vector<2x32xf32>
    %112 = vector.shape_cast %111 : vector<2x32xf32> to vector<2x1x32xf32>
    %113 = vector.broadcast %109 : vector<1x8x1xf32> to vector<2x8x32xf32>
    %114 = vector.broadcast %112 : vector<2x1x32xf32> to vector<2x8x32xf32>
    %115 = arith.mulf %113, %114 : vector<2x8x32xf32>
    %116 = arith.addf %106, %115 : vector<2x8x32xf32>
    %117 = vector.extract_strided_slice %5 {offsets = [11, 0], sizes = [1, 8], strides = [1, 1]} : vector<12x8xf32> to vector<1x8xf32>
    %118 = vector.shape_cast %117 : vector<1x8xf32> to vector<8xf32>
    %119 = vector.shape_cast %118 : vector<8xf32> to vector<1x8x1xf32>
    %120 = vector.extract_strided_slice %4 {offsets = [0, 11, 0], sizes = [2, 1, 32], strides = [1, 1, 1]} : vector<2x12x32xf32> to vector<2x1x32xf32>
    %121 = vector.shape_cast %120 : vector<2x1x32xf32> to vector<2x32xf32>
    %122 = vector.shape_cast %121 : vector<2x32xf32> to vector<2x1x32xf32>
    %123 = vector.broadcast %119 : vector<1x8x1xf32> to vector<2x8x32xf32>
    %124 = vector.broadcast %122 : vector<2x1x32xf32> to vector<2x8x32xf32>
    %125 = arith.mulf %123, %124 : vector<2x8x32xf32>
    %126 = arith.addf %116, %125 : vector<2x8x32xf32>
    %127 = vector.shape_cast %126 : vector<2x8x32xf32> to vector<2x256xf32>
    %c0_7 = arith.constant 0 : index
    %c0_8 = arith.constant 0 : index
    %128 = vector.load %arg4[%c0_7, %c0_8] : memref<1x256xf32, #tpu.memory_space<vmem>>, vector<1x256xf32>
    %129 = vector.broadcast %128 : vector<1x256xf32> to vector<2x256xf32>
    %130 = arith.addf %127, %129 : vector<2x256xf32>
    %c0_9 = arith.constant 0 : index
    %c0_10 = arith.constant 0 : index
    %131 = vector.load %arg5[%c0_9, %c0_10] : memref<2x256xf32, #tpu.memory_space<vmem>>, vector<2x256xf32>
    tpu.vector_store %arg5[%c0_9, %c0_10], %130 {strides = array<i32>} : memref<2x256xf32, #tpu.memory_space<vmem>>, vector<2x256xf32>,
    return
  }
  func.func @transform_0(%arg0: i32) -> (i32, i32, i32) {
    %c0_i32 = arith.constant 0 : i32
    %c0_i32_0 = arith.constant 0 : i32
    %c0_i32_1 = arith.constant 0 : i32
    return %arg0, %c0_i32, %c0_i32_0 : i32, i32, i32
  }
  func.func @transform_1(%arg0: i32) -> (i32, i32) {
    %c0_i32 = arith.constant 0 : i32
    %c0_i32_0 = arith.constant 0 : i32
    %c0_i32_1 = arith.constant 0 : i32
    return %c0_i32, %c0_i32_0 : i32, i32
  }
  func.func @transform_2(%arg0: i32) -> (i32, i32) {
    %c0_i32 = arith.constant 0 : i32
    %c0_i32_0 = arith.constant 0 : i32
    %c0_i32_1 = arith.constant 0 : i32
    return %c0_i32, %c0_i32_0 : i32, i32
  }
  func.func @transform_3(%arg0: i32) -> (i32, i32) {
    %c0_i32 = arith.constant 0 : i32
    %c0_i32_0 = arith.constant 0 : i32
    %c0_i32_1 = arith.constant 0 : i32
    return %c0_i32, %c0_i32_0 : i32, i32
  }
  func.func @transform_4(%arg0: i32) -> (i32, i32) {
    %c0_i32 = arith.constant 0 : i32
    %c0_i32_0 = arith.constant 0 : i32
    return %arg0, %c0_i32 : i32, i32
  }
}

</mosaic_0001>

<llo_original>
// kernel: tpu_custom_call.1
$region0: #{tpu_custom_call.1}
  #allocation0 [shape = 'u32[]', space=smem, size = 0x4, offset = 0x4, fixed_abs, tag = 'smem constant byte address 0x4 - core index']
  #allocation1 [shape = 'u32[144,128]{1,0:T(1,128)}', space=vmem, size = 0x12000, scoped, tag = 'internal scratch']
  %s0 = inlined_call_operand.vmem [shape: f32[2,12,196], index: 0, kind: input, shape index: {}]
  %s1 = inlined_call_operand.vmem [shape: f32[196,32], index: 1, kind: input, shape index: {}]
  %s2 = inlined_call_operand.vmem [shape: f32[12,8], index: 2, kind: input, shape index: {}]
  %s3 = inlined_call_operand.vmem [shape: f32[1,256], index: 3, kind: input, shape index: {}]
  %s4 = inlined_call_operand.hbm [shape: f32[2,256], index: 4, kind: output, shape index: {}]
  %s5 = sld [smem:[#allocation0]]
  $region26: #{tpu_custom_call.1} parent=0
    _
  %s7 = ssub.s32 1, %s5
  %s8 = scalar_select 0, %s7, %s5
  $region1: #{tpu_custom_call.1} parent=0
    #allocation2 [shape = 'u8[2048]{0}', space=vmem, size = 0x800, scoped, tag = 'output window, operand 0, single buffered']
    #allocation3 [shape = 's32[1]{0}', space=sflag, size = 0x4, scoped, tag = 'scoped memory for tpu_custom_call.1']
    %9 = vsyncpa [#allocation3], 0
    // Predicated region
    $region2: #{tpu_custom_call.1} parent=1 // pred_check
      _
    $region3: #{tpu_custom_call.1} parent=1 // pred_check_branch
      %11 = sbr.rel (0) target = $region5
    $region4: #{tpu_custom_call.1} parent=1 // pred_region
      _
    $region5: #{tpu_custom_call.1} parent=1 // pred_fallthru
      _
    // Predicated region
    $region6: #{tpu_custom_call.1} parent=1 // pred_check
      _
    $region7: #{tpu_custom_call.1} parent=1 // pred_check_branch
      %13 = sbr.rel (0) target = $region9
    $region8: #{tpu_custom_call.1} parent=1 // pred_region
      _
    $region9: #{tpu_custom_call.1} parent=1 // pred_fallthru
      _
    // Predicated region
    $region10: #{tpu_custom_call.1} parent=1 // pred_check
      _
    $region11: #{tpu_custom_call.1} parent=1 // pred_check_branch
      %15 = sbr.rel (0) target = $region13
    $region12: #{tpu_custom_call.1} parent=1 // pred_region
      _
    $region13: #{tpu_custom_call.1} parent=1 // pred_fallthru
      _
    // Predicated region
    $region14: #{tpu_custom_call.1} parent=1 // pred_check
      _
    $region15: #{tpu_custom_call.1} parent=1 // pred_check_branch
      %17 = sbr.rel (0) target = $region17
    $region16: #{tpu_custom_call.1} parent=1 // pred_region
      _
    $region17: #{tpu_custom_call.1} parent=1 // pred_fallthru
      _
    %v18 = vld [vmem:[%s0] sm:$0xff]
    %v19 = vld [vmem:[%s0 + $0x8] sm:$0xff]
    %v20 = vld [vmem:[%s0 + $0x10] sm:$0xf]
    %v21 = vld [vmem:[%s0 + $0x18] sm:$0xf]
    %v22 = vld [vmem:[%s0 + $0x20] sm:$0xff]
    %v23 = vld [vmem:[%s0 + $0x28] sm:$0xff]
    %v24 = vld [vmem:[%s0 + $0x30] sm:$0xf]
    %v25 = vld [vmem:[%s0 + $0x38] sm:$0xf]
    %v34 = vcombine.low %v18, %v19
    %v35 = vcombine.high %v18, %v19
    %v36 = vcombine.low %v20, %v21
    %v37 = vcombine.low %v22, %v23
    %v38 = vcombine.high %v22, %v23
    %v39 = vcombine.low %v24, %v25
    %v40 = vld [vmem:[%s1] sm:$0xff]
    %v41 = vld [vmem:[%s1 + $0x8] sm:$0xff]
    %v42 = vld [vmem:[%s1 + $0x10] sm:$0xff]
    %v43 = vld [vmem:[%s1 + $0x18] sm:$0xff]
    %v44 = vld [vmem:[%s1 + $0x20] sm:$0xff]
    %v45 = vld [vmem:[%s1 + $0x28] sm:$0xff]
    %v46 = vld [vmem:[%s1 + $0x30] sm:$0xff]
    %v47 = vld [vmem:[%s1 + $0x38] sm:$0xff]
    %v48 = vld [vmem:[%s1 + $0x40] sm:$0xff]
    %v49 = vld [vmem:[%s1 + $0x48] sm:$0xff]
    %v50 = vld [vmem:[%s1 + $0x50] sm:$0xff]
    %v51 = vld [vmem:[%s1 + $0x58] sm:$0xff]
    %v52 = vld [vmem:[%s1 + $0x60] sm:$0xff]
    %v53 = vld [vmem:[%s1 + $0x68] sm:$0xff]
    %v54 = vld [vmem:[%s1 + $0x70] sm:$0xff]
    %v55 = vld [vmem:[%s1 + $0x78] sm:$0xff]
    %v56 = vld [vmem:[%s1 + $0x80] sm:$0xff]
    %v57 = vld [vmem:[%s1 + $0x88] sm:$0xff]
    %v58 = vld [vmem:[%s1 + $0x90] sm:$0xff]
    %v59 = vld [vmem:[%s1 + $0x98] sm:$0xff]
    %v60 = vld [vmem:[%s1 + $0xa0] sm:$0xff]
    %v61 = vld [vmem:[%s1 + $0xa8] sm:$0xff]
    %v62 = vld [vmem:[%s1 + $0xb0] sm:$0xff]
    %v63 = vld [vmem:[%s1 + $0xb8] sm:$0xff]
    %v64 = vld [vmem:[%s1 + $0xc0] sm:$0xf]
    %v65 = vcombine.low %v34, %v35
    %v66 = vcombine.high %v34, %v35
    %v67 = vcombine.low %v36, %v37
    %v68 = vcombine.high %v36, %v37
    %v69 = vcombine.low %v38, %v39
    %v70 = vcombine.high %v38, %v39
    %vm74 = vcmask 556032
    %v75 = vsel %vm74, %v66, 0
    %v77 = vsel %vm74, %v68, 0
    %v79 = vsel %vm74, %v70, 0
    %vm81 = vcmask 1043456
    %v83 = vsel %vm81, %v64, 0
    %85 = vmatprep.subr.mxu0 0.0
    %86 = vmatpush1.msra.mxu0 %v40
    %87 = vmatprep.subr.mxu0 0.0
    %88 = vmatpush1.msra.mxu0 %v41
    %89 = vmatprep.subr.mxu0 0.0
    %90 = vmatpush1.msra.mxu0 %v42
    %91 = vmatprep.subr.mxu0 0.0
    %92 = vmatpush1.msra.mxu0 %v43
    %93 = vmatprep.subr.mxu0 0.0
    %94 = vmatpush1.msra.mxu0 %v44
    %95 = vmatprep.subr.mxu0 0.0
    %96 = vmatpush1.msra.mxu0 %v45
    %97 = vmatprep.subr.mxu0 0.0
    %98 = vmatpush1.msra.mxu0 %v46
    %99 = vmatprep.subr.mxu0 0.0
    %100 = vmatpush1.msra.mxu0 %v47
    %101 = vmatprep.subr.mxu0 0.0
    %102 = vmatpush1.msra.mxu0 %v48
    %103 = vmatprep.subr.mxu0 0.0
    %104 = vmatpush1.msra.mxu0 %v49
    %105 = vmatprep.subr.mxu0 0.0
    %106 = vmatpush1.msra.mxu0 %v50
    %107 = vmatprep.subr.mxu0 0.0
    %108 = vmatpush1.msra.mxu0 %v51
    %109 = vmatprep.subr.mxu0 0.0
    %110 = vmatpush1.msra.mxu0 %v52
    %111 = vmatprep.subr.mxu0 0.0
    %112 = vmatpush1.msra.mxu0 %v53
    %113 = vmatprep.subr.mxu0 0.0
    %114 = vmatpush1.msra.mxu0 %v54
    %115 = vmatprep.subr.mxu0 0.0
    %116 = vmatpush1.msra.mxu0 %v55
    %117 = vmatprep.subr.mxu0 0.0
    %118 = vmatpush1.msra.mxu0 %v56
    %119 = vmatprep.subr.mxu0 0.0
    %120 = vmatpush1.msra.mxu0 %v57
    %121 = vmatprep.subr.mxu0 0.0
    %122 = vmatpush1.msra.mxu0 %v58
    %123 = vmatprep.subr.mxu0 0.0
    %124 = vmatpush1.msra.mxu0 %v59
    %125 = vmatprep.subr.mxu0 0.0
    %126 = vmatpush1.msra.mxu0 %v60
    %127 = vmatprep.subr.mxu0 0.0
    %128 = vmatpush1.msra.mxu0 %v61
    %129 = vmatprep.subr.mxu0 0.0
    %130 = vmatpush1.msra.mxu0 %v62
    %131 = vmatprep.subr.mxu0 0.0
    %132 = vmatpush1.msra.mxu0 %v63
    %133 = vmatprep.subr.mxu0 0.0
    %134 = vmatpush1.msra.mxu0 %v83
    %135 = vmatprep.subr.mxu0 0.0
    %136 = vmatpush1.msra.mxu0 0.0
    %137 = vmatprep.subr.mxu0 0.0
    %138 = vmatpush1.msra.mxu0 0.0
    %139 = vmatprep.subr.mxu0 0.0
    %140 = vmatpush1.msra.mxu0 0.0
    %141 = vmatprep.subr.mxu0 0.0
    %142 = vmatpush1.msra.mxu0 0.0
    %143 = vmatprep.subr.mxu0 0.0
    %144 = vmatpush1.msra.mxu0 0.0
    %145 = vmatprep.subr.mxu0 0.0
    %146 = vmatpush1.msra.mxu0 0.0
    %147 = vmatprep.subr.mxu0 0.0
    %148 = vmatpush1.msra.mxu0 0.0
    %149 = vmatprep.mubr.f32.mxu0 %v75
    %150 = vmatmul.mubr.f32.gmra.mrb[0].mxu0 %v65
    %v151 = vpop.f32.mrb[0].mxu0
    %v152 = vadd.f32 0.0, %v151
    %v153 = vpop.f32.mrb[0].mxu0
    %154 = vmatprep.mubr.f32.mxu0 %v77
    %155 = vmatmul.mubr.f32.gmra.mrb[0].mxu0 %v67
    %v156 = vpop.f32.mrb[0].mxu0
    %v157 = vadd.f32 0.0, %v156
    %v158 = vpop.f32.mrb[0].mxu0
    %159 = vmatprep.mubr.f32.mxu0 %v79
    %160 = vmatmul.mubr.f32.gmra.mrb[0].mxu0 %v69
    %v161 = vpop.f32.mrb[0].mxu0
    %v162 = vadd.f32 0.0, %v161
    %v163 = vpop.f32.mrb[0].mxu0
    %164 = vdwg.mxu0
    %v168 = vcombine.high %v152, %v152
    %v169 = vcombine.high %v157, %v157
    %v170 = vcombine.high %v162, %v162
    %v174 = vld [vmem:[%s2] sm:$0xff]
    %v175 = vld [vmem:[%s2 + $0x8] sm:$0xf]
    %v176 = vlaneseq
    %v177 = vshrl.u32 %v176, 7
    %v178 = vsub.s32 0, %v177
    %v179 = vrot.slane %v174, %v178
    %181 = vbcast.lane.b32.xlu0 %v179, 256
    %v182 = vpop.permute.xlu0 %181
    %v183 = vlaneseq
    %v184 = vshrl.u32 %v183, 7
    %v185 = vsub.s32 0, %v184
    %v186 = vrot.slane %v152, %v185
    %v187 = vlaneseq
    %v188 = vshrl.u32 %v187, 7
    %v189 = vsub.s32 0, %v188
    %v190 = vrot.slane %v169, %v189
    %v191 = vmul.f32 %v182, %v186
    %v192 = vmul.f32 %v182, %v190
    %v193 = vadd.f32 %v191, 0.0
    %v194 = vadd.f32 %v192, 0.0
    %v195 = vlaneseq
    %v196 = vshrl.u32 %v195, 7
    %v197 = vsub.s32 1, %v196
    %v198 = vrot.slane %v174, %v197
    %200 = vbcast.lane.b32.xlu0 %v198, 256
    %v201 = vpop.permute.xlu0 %200
    %v202 = vlaneseq
    %v203 = vshrl.u32 %v202, 7
    %v204 = vsub.s32 1, %v203
    %v205 = vrot.slane %v152, %v204
    %v206 = vlaneseq
    %v207 = vshrl.u32 %v206, 7
    %v208 = vsub.s32 1, %v207
    %v209 = vrot.slane %v169, %v208
    %v210 = vmul.f32 %v201, %v205
    %v211 = vmul.f32 %v201, %v209
    %v212 = vadd.f32 %v193, %v210
    %v213 = vadd.f32 %v194, %v211
    %v214 = vlaneseq
    %v215 = vshrl.u32 %v214, 7
    %v216 = vsub.s32 2, %v215
    %v217 = vrot.slane %v174, %v216
    %219 = vbcast.lane.b32.xlu0 %v217, 256
    %v220 = vpop.permute.xlu0 %219
    %v221 = vlaneseq
    %v222 = vshrl.u32 %v221, 7
    %v223 = vsub.s32 2, %v222
    %v224 = vrot.slane %v152, %v223
    %v225 = vlaneseq
    %v226 = vshrl.u32 %v225, 7
    %v227 = vsub.s32 2, %v226
    %v228 = vrot.slane %v169, %v227
    %v229 = vmul.f32 %v220, %v224
    %v230 = vmul.f32 %v220, %v228
    %v231 = vadd.f32 %v212, %v229
    %v232 = vadd.f32 %v213, %v230
    %v233 = vlaneseq
    %v234 = vshrl.u32 %v233, 7
    %v235 = vsub.s32 3, %v234
    %v236 = vrot.slane %v174, %v235
    %238 = vbcast.lane.b32.xlu0 %v236, 256
    %v239 = vpop.permute.xlu0 %238
    %v240 = vlaneseq
    %v241 = vshrl.u32 %v240, 7
    %v242 = vsub.s32 3, %v241
    %v243 = vrot.slane %v152, %v242
    %v244 = vlaneseq
    %v245 = vshrl.u32 %v244, 7
    %v246 = vsub.s32 3, %v245
    %v247 = vrot.slane %v169, %v246
    %v248 = vmul.f32 %v239, %v243
    %v249 = vmul.f32 %v239, %v247
    %v250 = vadd.f32 %v231, %v248
    %v251 = vadd.f32 %v232, %v249
    %v252 = vlaneseq
    %v253 = vshrl.u32 %v252, 7
    %v254 = vsub.s32 4, %v253
    %v255 = vrot.slane %v174, %v254
    %257 = vbcast.lane.b32.xlu0 %v255, 256
    %v258 = vpop.permute.xlu0 %257
    %v259 = vlaneseq
    %v260 = vshrl.u32 %v259, 7
    %v261 = vsub.s32 0, %v260
    %v262 = vrot.slane %v168, %v261
    %v263 = vlaneseq
    %v264 = vshrl.u32 %v263, 7
    %v265 = vsub.s32 0, %v264
    %v266 = vrot.slane %v162, %v265
    %v267 = vmul.f32 %v258, %v262
    %v268 = vmul.f32 %v258, %v266
    %v269 = vadd.f32 %v250, %v267
    %v270 = vadd.f32 %v251, %v268
    %v271 = vlaneseq
    %v272 = vshrl.u32 %v271, 7
    %v273 = vsub.s32 5, %v272
    %v274 = vrot.slane %v174, %v273
    %276 = vbcast.lane.b32.xlu0 %v274, 256
    %v277 = vpop.permute.xlu0 %276
    %v278 = vlaneseq
    %v279 = vshrl.u32 %v278, 7
    %v280 = vsub.s32 1, %v279
    %v281 = vrot.slane %v168, %v280
    %v282 = vlaneseq
    %v283 = vshrl.u32 %v282, 7
    %v284 = vsub.s32 1, %v283
    %v285 = vrot.slane %v162, %v284
    %v286 = vmul.f32 %v277, %v281
    %v287 = vmul.f32 %v277, %v285
    %v288 = vadd.f32 %v269, %v286
    %v289 = vadd.f32 %v270, %v287
    %v290 = vlaneseq
    %v291 = vshrl.u32 %v290, 7
    %v292 = vsub.s32 6, %v291
    %v293 = vrot.slane %v174, %v292
    %295 = vbcast.lane.b32.xlu0 %v293, 256
    %v296 = vpop.permute.xlu0 %295
    %v297 = vlaneseq
    %v298 = vshrl.u32 %v297, 7
    %v299 = vsub.s32 2, %v298
    %v300 = vrot.slane %v168, %v299
    %v301 = vlaneseq
    %v302 = vshrl.u32 %v301, 7
    %v303 = vsub.s32 2, %v302
    %v304 = vrot.slane %v162, %v303
    %v305 = vmul.f32 %v296, %v300
    %v306 = vmul.f32 %v296, %v304
    %v307 = vadd.f32 %v288, %v305
    %v308 = vadd.f32 %v289, %v306
    %v309 = vlaneseq
    %v310 = vshrl.u32 %v309, 7
    %v311 = vsub.s32 7, %v310
    %v312 = vrot.slane %v174, %v311
    %314 = vbcast.lane.b32.xlu0 %v312, 256
    %v315 = vpop.permute.xlu0 %314
    %v316 = vlaneseq
    %v317 = vshrl.u32 %v316, 7
    %v318 = vsub.s32 3, %v317
    %v319 = vrot.slane %v168, %v318
    %v320 = vlaneseq
    %v321 = vshrl.u32 %v320, 7
    %v322 = vsub.s32 3, %v321
    %v323 = vrot.slane %v162, %v322
    %v324 = vmul.f32 %v315, %v319
    %v325 = vmul.f32 %v315, %v323
    %v326 = vadd.f32 %v307, %v324
    %v327 = vadd.f32 %v308, %v325
    %v328 = vlaneseq
    %v329 = vshrl.u32 %v328, 7
    %v330 = vsub.s32 0, %v329
    %v331 = vrot.slane %v175, %v330
    %333 = vbcast.lane.b32.xlu0 %v331, 256
    %v334 = vpop.permute.xlu0 %333
    %v335 = vlaneseq
    %v336 = vshrl.u32 %v335, 7
    %v337 = vsub.s32 0, %v336
    %v338 = vrot.slane %v157, %v337
    %v339 = vlaneseq
    %v340 = vshrl.u32 %v339, 7
    %v341 = vsub.s32 0, %v340
    %v342 = vrot.slane %v170, %v341
    %v343 = vmul.f32 %v334, %v338
    %v344 = vmul.f32 %v334, %v342
    %v345 = vadd.f32 %v326, %v343
    %v346 = vadd.f32 %v327, %v344
    %v347 = vlaneseq
    %v348 = vshrl.u32 %v347, 7
    %v349 = vsub.s32 1, %v348
    %v350 = vrot.slane %v175, %v349
    %352 = vbcast.lane.b32.xlu0 %v350, 256
    %v353 = vpop.permute.xlu0 %352
    %v354 = vlaneseq
    %v355 = vshrl.u32 %v354, 7
    %v356 = vsub.s32 1, %v355
    %v357 = vrot.slane %v157, %v356
    %v358 = vlaneseq
    %v359 = vshrl.u32 %v358, 7
    %v360 = vsub.s32 1, %v359
    %v361 = vrot.slane %v170, %v360
    %v362 = vmul.f32 %v353, %v357
    %v363 = vmul.f32 %v353, %v361
    %v364 = vadd.f32 %v345, %v362
    %v365 = vadd.f32 %v346, %v363
    %v366 = vlaneseq
    %v367 = vshrl.u32 %v366, 7
    %v368 = vsub.s32 2, %v367
    %v369 = vrot.slane %v175, %v368
    %371 = vbcast.lane.b32.xlu0 %v369, 256
    %v372 = vpop.permute.xlu0 %371
    %v373 = vlaneseq
    %v374 = vshrl.u32 %v373, 7
    %v375 = vsub.s32 2, %v374
    %v376 = vrot.slane %v157, %v375
    %v377 = vlaneseq
    %v378 = vshrl.u32 %v377, 7
    %v379 = vsub.s32 2, %v378
    %v380 = vrot.slane %v170, %v379
    %v381 = vmul.f32 %v372, %v376
    %v382 = vmul.f32 %v372, %v380
    %v383 = vadd.f32 %v364, %v381
    %v384 = vadd.f32 %v365, %v382
    %v385 = vlaneseq
    %v386 = vshrl.u32 %v385, 7
    %v387 = vsub.s32 3, %v386
    %v388 = vrot.slane %v175, %v387
    %390 = vbcast.lane.b32.xlu0 %v388, 256
    %v391 = vpop.permute.xlu0 %390
    %v392 = vlaneseq
    %v393 = vshrl.u32 %v392, 7
    %v394 = vsub.s32 3, %v393
    %v395 = vrot.slane %v157, %v394
    %v396 = vlaneseq
    %v397 = vshrl.u32 %v396, 7
    %v398 = vsub.s32 3, %v397
    %v399 = vrot.slane %v170, %v398
    %v400 = vmul.f32 %v391, %v395
    %v401 = vmul.f32 %v391, %v399
    %v402 = vadd.f32 %v383, %v400
    %v403 = vadd.f32 %v384, %v401
    %v404 = vcombine.high %v402, 0.0
    %v406 = vunpack.c.l.s4 1983009808
    %v407 = vunpack.c.0.s8 %v406
    %v408 = vlaneseq
    %v409 = vshrl.u32 %v408, 7
    %v410 = vsub.s32 %v407, %v409
    %v411 = vrot.slane %v402, %v410
    %v413 = vunpack.c.l.s4 1983009808
    %v414 = vunpack.c.0.s8 %v413
    %v415 = vlaneseq
    %v416 = vshrl.u32 %v415, 7
    %v417 = vsub.s32 %v414, %v416
    %v418 = vrot.slane %v404, %v417
    %v419 = vcombine.high %v403, 0.0
    %v421 = vunpack.c.l.s4 1983009808
    %v422 = vunpack.c.0.s8 %v421
    %v423 = vlaneseq
    %v424 = vshrl.u32 %v423, 7
    %v425 = vsub.s32 %v422, %v424
    %v426 = vrot.slane %v403, %v425
    %v428 = vunpack.c.l.s4 1983009808
    %v429 = vunpack.c.0.s8 %v428
    %v430 = vlaneseq
    %v431 = vshrl.u32 %v430, 7
    %v432 = vsub.s32 %v429, %v431
    %v433 = vrot.slane %v419, %v432
    %v434 = vcombine.low %v411, %v426
    %v435 = vcombine.high %v411, %v426
    %v437 = vunpack.c.l.s4 1934713408
    %v438 = vunpack.c.0.s8 %v437
    %v439 = vlaneseq
    %v440 = vshrl.u32 %v439, 7
    %v441 = vsub.s32 %v438, %v440
    %v442 = vrot.slane %v434, %v441
    %v444 = vunpack.c.l.s4 1934713408
    %v445 = vunpack.c.0.s8 %v444
    %v446 = vlaneseq
    %v447 = vshrl.u32 %v446, 7
    %v448 = vsub.s32 %v445, %v447
    %v449 = vrot.slane %v435, %v448
    %v450 = vcombine.low %v418, %v433
    %v451 = vcombine.high %v418, %v433
    %v453 = vunpack.c.l.s4 1934713408
    %v454 = vunpack.c.0.s8 %v453
    %v455 = vlaneseq
    %v456 = vshrl.u32 %v455, 7
    %v457 = vsub.s32 %v454, %v456
    %v458 = vrot.slane %v450, %v457
    %v460 = vunpack.c.l.s4 1934713408
    %v461 = vunpack.c.0.s8 %v460
    %v462 = vlaneseq
    %v463 = vshrl.u32 %v462, 7
    %v464 = vsub.s32 %v461, %v463
    %v465 = vrot.slane %v451, %v464
    %v466 = vcombine.high %v442, 0.0
    %v467 = vcombine.high %v449, 0.0
    %v468 = vcombine.high %v458, 0.0
    %v469 = vcombine.high %v465, 0.0
    %471 = vrot.lane.b32.xlu0 %v466, 32
    %v472 = vpop.permute.xlu0 %471
    %475 = vrot.lane.b32.xlu0 %v449, 64
    %v476 = vpop.permute.xlu0 %475
    %479 = vrot.lane.b32.xlu0 %v467, 96
    %v480 = vpop.permute.xlu0 %479
    %483 = vrot.lane.b32.xlu0 %v468, 32
    %v484 = vpop.permute.xlu0 %483
    %487 = vrot.lane.b32.xlu0 %v465, 64
    %v488 = vpop.permute.xlu0 %487
    %491 = vrot.lane.b32.xlu0 %v469, 96
    %v492 = vpop.permute.xlu0 %491
    %vm494 = vcmask 261120
    %v495 = vsel %vm494, %v442, %v472
    %vm496 = vcmask 523264
    %v497 = vsel %vm496, %v495, %v476
    %vm498 = vcmask 785408
    %v499 = vsel %vm498, %v497, %v480
    %v500 = vsel %vm494, %v458, %v484
    %v501 = vsel %vm496, %v500, %v488
    %v502 = vsel %vm498, %v501, %v492
    %v503 = vld [vmem:[%s3] sm:$0x3]
    %v505 = vlaneseq
    %v506 = vshrl.u32 %v505, 7
    %v507 = vsub.s32 0, %v506
    %v508 = vrot.slane %v503, %v507
    %v509 = vlaneseq
    %v510 = vshrl.u32 %v509, 7
    %v511 = vsub.s32 1, %v510
    %v512 = vrot.slane %v503, %v511
    %v515 = vadd.f32 %v499, %v508
    %v516 = vadd.f32 %v502, %v512
    %v519 = vcombine.low %v515, %v516
    %v521 = vunpack.c.l.s4 1983009808
    %v522 = vunpack.c.0.s8 %v521
    %v523 = vlaneseq
    %v524 = vshrl.u32 %v523, 7
    %v525 = vsub.s32 %v522, %v524
    %v526 = vrot.slane %v519, %v525
    %528 = vst [vmem:[#allocation2] sm:$0xf] %v526
    // Predicated region
    $region18: #{tpu_custom_call.1} parent=1 // pred_check
      _
    $region19: #{tpu_custom_call.1} parent=1 // pred_check_branch
      %530 = sbr.rel (0) target = $region21
    $region20: #{tpu_custom_call.1} parent=1 // pred_region
      %s532 = ssub.s32 64, 64
      %533 = vsyncadd [#allocation3], %s532
      %s535 = sshll.u32 [#allocation2], 4
      %s536 = int_to_ptr.vmem [resolvable:$true] %s535
      %538 = dma.vmem_to_hbm [thread:$0]  %s536, 64, %s4, [#allocation3]
    $region21: #{tpu_custom_call.1} parent=1 // pred_fallthru
      _
    // Predicated region
    $region22: #{tpu_custom_call.1} parent=1 // pred_check
      _
    $region23: #{tpu_custom_call.1} parent=1 // pred_check_branch
      %540 = sbr.rel (0) target = $region25
    $region24: #{tpu_custom_call.1} parent=1 // pred_region
      %541 = dma.done [#allocation3], 64
    $region25: #{tpu_custom_call.1} parent=1 // pred_fallthru
      _
    %542 = vsyncpa [#allocation3], 1

</llo_original>
